<compile_context>
chip_gen: v6e
topology: v6e:2x2x1
jax: 0.10.0
libtpu: 0.0.40
codegen_flags: <defaults>
</compile_context>

<pallas_src>
import jax
import jax.numpy as jnp
from jax.experimental import pallas as pl
from jax.experimental.pallas import tpu as pltpu


def _round_up(n: int, m: int) -> int:
    return ((n + m - 1) // m) * m


def _make_masked_kernel(fill: float):
    def kernel(h_ref, w_ref, b_ref, p_ref, o_ref):
        # h_ref: (TS, H) native dtype; w_ref: (1, H) f32; b_ref: (1,) f32 (SMEM)
        # p_ref: (1, TS) f32;           o_ref: (1, TS) f32
        x = jnp.sum(h_ref[...] * w_ref[...], axis=-1) + b_ref[0]     # (TS,) f32
        p = p_ref[...]                                               # (1, TS)
        o_ref[...] = (x[None, :] * p - fill * (1.0 - p)).astype(o_ref.dtype)
    return kernel


def _nomask_kernel(h_ref, w_ref, b_ref, o_ref):
    x = jnp.sum(h_ref[...] * w_ref[...], axis=-1) + b_ref[0]         # (TS,) f32
    o_ref[...] = x[None, :].astype(o_ref.dtype)


def pooler_start_logits(hidden_states, weight, bias, p_mask=None, *, block_rows=1024):
    """hidden_states: (B, S, H) (f32/bf16/f16), weight: (H,), bias: (),
    p_mask: optional (B, S); p_mask == 1.0 keeps the logit, 0.0 masks it to
    -1e30 (-65500 if the parameters are fp16), exactly like the PyTorch module.
    Returns (B, S) float32 logits."""
    B, S, H = hidden_states.shape
    N = B * S

    # fp16 parameters -> smaller mask fill (matches the PyTorch branch).
    fill = 65500.0 if weight.dtype == jnp.float16 else 1e30

    # Row-tile size: multiple of 128 (lane-dense output / mask blocks), capped
    # so two double-buffered hidden slabs stay within a conservative VMEM
    # budget on every generation (v5e 16 MiB / v6e 32 MiB / v7x 32 MiB scoped).
    bytes_per_row = H * hidden_states.dtype.itemsize
    vmem_budget_per_buf = 4 * 1024 * 1024
    ts_cap = max(128, (vmem_budget_per_buf // bytes_per_row) // 128 * 128)
    TS = min(block_rows, ts_cap, _round_up(N, 128))
    N_pad = _round_up(N, TS)
    grid = (N_pad // TS,)

    h_flat = hidden_states.reshape(N, H)
    if N_pad != N:
        h_flat = jnp.pad(h_flat, ((0, N_pad - N), (0, 0)))

    # Weight kept resident in f32 -> products / accumulation in f32.
    w_row = weight.reshape(1, H).astype(jnp.float32)
    b_vec = jnp.reshape(bias, (1,)).astype(jnp.float32)

    h_spec = pl.BlockSpec((TS, H), lambda i: (i, 0))
    w_spec = pl.BlockSpec((1, H), lambda i: (0, 0))            # constant: DMA'd once
    b_spec = pl.BlockSpec(memory_space=pltpu.MemorySpace.SMEM)  # scalar bias in SMEM
    o_spec = pl.BlockSpec((1, TS), lambda i: (0, i))           # lane-dense output

    out_shape = jax.ShapeDtypeStruct((1, N_pad), jnp.float32)
    compiler_params = pltpu.CompilerParams(dimension_semantics=("parallel",))
    bytes_h = N_pad * H * hidden_states.dtype.itemsize

    if p_mask is not None:
        p_flat = p_mask.reshape(N).astype(jnp.float32)
        if N_pad != N:
            p_flat = jnp.pad(p_flat, (0, N_pad - N))
        p_flat = p_flat.reshape(1, N_pad)
        cost = pl.CostEstimate(
            flops=2 * N_pad * H + 4 * N_pad,
            transcendentals=0,
            bytes_accessed=bytes_h + 2 * N_pad * 4 + H * 4 + 4,
        )
        out = pl.pallas_call(
            _make_masked_kernel(fill),
            out_shape=out_shape,
            grid=grid,
            in_specs=[h_spec, w_spec, b_spec, pl.BlockSpec((1, TS), lambda i: (0, i))],
            out_specs=o_spec,
            compiler_params=compiler_params,
            cost_estimate=cost,
        )(h_flat, w_row, b_vec, p_flat)
    else:
        cost = pl.CostEstimate(
            flops=2 * N_pad * H,
            transcendentals=0,
            bytes_accessed=bytes_h + N_pad * 4 + H * 4 + 4,
        )
        out = pl.pallas_call(
            _nomask_kernel,
            out_shape=out_shape,
            grid=grid,
            in_specs=[h_spec, w_spec, b_spec],
            out_specs=o_spec,
            compiler_params=compiler_params,
            cost_estimate=cost,
        )(h_flat, w_row, b_vec)

    return out[0, :N].reshape(B, S)


if __name__ == "__main__":
    key = jax.random.PRNGKey(0)
    k_h, k_w, k_b, k_m = jax.random.split(key, 4)

    def ref_fn(h, w, b, p, fill=1e30):
        x = h.astype(jnp.float32) @ w.astype(jnp.float32) + jnp.float32(b)
        if p is None:
            return x
        return x * p - fill * (1.0 - p)

    # Small shapes consistent with the module: batch=2, seq=8, hidden=32.
    B, S, H = 2, 8, 32
    hidden_states = jax.random.normal(k_h, (B, S, H), dtype=jnp.float32)
    weight = jax.random.normal(k_w, (H,), dtype=jnp.float32) * 0.02
    bias = jax.random.normal(k_b, (), dtype=jnp.float32) * 0.02
    p_mask = (jax.random.uniform(k_m, (B, S)) > 0.5).astype(jnp.float32)

    # Masked path.
    out = jax.block_until_ready(pooler_start_logits(hidden_states, weight, bias, p_mask))
    assert out.shape == (B, S)
    assert jnp.allclose(out, ref_fn(hidden_states, weight, bias, p_mask), rtol=1e-5, atol=1e-5)

    # No-mask path (no dense ones array streamed).
    out_nm = jax.block_until_ready(pooler_start_logits(hidden_states, weight, bias, None))
    assert jnp.allclose(out_nm, ref_fn(hidden_states, weight, bias, None), rtol=1e-5, atol=1e-5)

    # bf16 activations streamed natively, f32 accumulation inside the kernel.
    h_bf16 = hidden_states.astype(jnp.bfloat16)
    out_bf = jax.block_until_ready(pooler_start_logits(h_bf16, weight, bias, p_mask))
    assert jnp.allclose(out_bf, ref_fn(h_bf16, weight, bias, p_mask), rtol=1e-3, atol=1e-3)

    # Multi-tile path: grid > 1 with a padded remainder tile.
    B2, S2, H2 = 2, 384, 128
    k_h2, k_m2 = jax.random.split(k_h)
    h2 = jax.random.normal(k_h2, (B2, S2, H2), dtype=jnp.float32)
    w2 = jax.random.normal(k_w, (H2,), dtype=jnp.float32) * 0.02
    p2 = (jax.random.uniform(k_m2, (B2, S2)) > 0.5).astype(jnp.float32)
    out2 = jax.block_until_ready(pooler_start_logits(h2, w2, bias, p2, block_rows=512))
    assert out2.shape == (B2, S2)
    assert jnp.allclose(out2, ref_fn(h2, w2, bias, p2), rtol=1e-5, atol=1e-5)

    print("KERNEL_OK")
</pallas_src>

<mosaic_0001>
module attributes {stable_mosaic.version = 11 : i64} {
  func.func @kernel(%arg0: i32, %arg1: memref<128x32xf32, #tpu.memory_space<vmem>>, %arg2: memref<1x32xf32, #tpu.memory_space<vmem>>, %arg3: memref<1xf32, #tpu.memory_space<smem>>, %arg4: memref<1x128xf32, #tpu.memory_space<vmem>>, %arg5: memref<1x128xf32, #tpu.memory_space<vmem>>) attributes {dimension_semantics = [#tpu.dimension_semantics<parallel>], iteration_bounds = array<i64: 1>, scalar_prefetch = 0 : i64, scratch_operands = 0 : i64, tpu.core_type = #tpu.core_type<tc>, window_params = [{transform_indices = @transform_0, window_bounds = array<i64: 128, 32>}, {pipeline_mode = #tpu.pipeline_mode<synchronous>, transform_indices = @transform_1, window_bounds = array<i64: 1, 32>}, {transform_indices = @transform_2, window_bounds = array<i64: 1>}, {transform_indices = @transform_3, window_bounds = array<i64: 1, 128>}, {transform_indices = @transform_4, window_bounds = array<i64: 1, 128>}]} {
    %c0 = arith.constant 0 : index
    %c0_0 = arith.constant 0 : index
    %0 = vector.load %arg1[%c0, %c0_0] : memref<128x32xf32, #tpu.memory_space<vmem>>, vector<128x32xf32>
    %c0_1 = arith.constant 0 : index
    %c0_2 = arith.constant 0 : index
    %1 = vector.load %arg2[%c0_1, %c0_2] : memref<1x32xf32, #tpu.memory_space<vmem>>, vector<1x32xf32>
    %2 = vector.broadcast %1 : vector<1x32xf32> to vector<128x32xf32>
    %3 = arith.mulf %0, %2 : vector<128x32xf32>
    %cst = arith.constant dense<0.000000e+00> : vector<128xf32>
    %4 = vector.multi_reduction <add>, %3, %cst [1] : vector<128x32xf32> to vector<128xf32>
    %c0_3 = arith.constant 0 : index
    %5 = memref.load %arg3[%c0_3] : memref<1xf32, #tpu.memory_space<smem>>
    %6 = vector.broadcast %5 : f32 to vector<128xf32>
    %7 = arith.addf %4, %6 : vector<128xf32>
    %c0_4 = arith.constant 0 : index
    %c0_5 = arith.constant 0 : index
    %8 = vector.load %arg4[%c0_4, %c0_5] : memref<1x128xf32, #tpu.memory_space<vmem>>, vector<1x128xf32>
    %9 = vector.shape_cast %7 : vector<128xf32> to vector<1x128xf32>
    %10 = arith.mulf %9, %8 : vector<1x128xf32>
    %cst_6 = arith.constant 1.000000e+00 : f32
    %11 = vector.broadcast %cst_6 : f32 to vector<1x128xf32>
    %12 = arith.subf %11, %8 : vector<1x128xf32>
    %cst_7 = arith.constant 1.000000e+30 : f32
    %13 = vector.broadcast %cst_7 : f32 to vector<1x128xf32>
    %14 = arith.mulf %13, %12 : vector<1x128xf32>
    %15 = arith.subf %10, %14 : vector<1x128xf32>
    %c0_8 = arith.constant 0 : index
    %c0_9 = arith.constant 0 : index
    %16 = vector.load %arg5[%c0_8, %c0_9] : memref<1x128xf32, #tpu.memory_space<vmem>>, vector<1x128xf32>
    tpu.vector_store %arg5[%c0_8, %c0_9], %15 {strides = array<i32>} : memref<1x128xf32, #tpu.memory_space<vmem>>, vector<1x128xf32>,
    return
  }
  func.func @transform_0(%arg0: i32) -> (i32, i32) {
    %c0_i32 = arith.constant 0 : i32
    %c0_i32_0 = arith.constant 0 : i32
    return %arg0, %c0_i32 : i32, i32
  }
  func.func @transform_1(%arg0: i32) -> (i32, i32) {
    %c0_i32 = arith.constant 0 : i32
    %c0_i32_0 = arith.constant 0 : i32
    %c0_i32_1 = arith.constant 0 : i32
    return %c0_i32, %c0_i32_0 : i32, i32
  }
  func.func @transform_2(%arg0: i32) -> i32 {
    %c0_i32 = arith.constant 0 : i32
    %c0_i32_0 = arith.constant 0 : i32
    return %c0_i32 : i32
  }
  func.func @transform_3(%arg0: i32) -> (i32, i32) {
    %c0_i32 = arith.constant 0 : i32
    %c0_i32_0 = arith.constant 0 : i32
    return %c0_i32, %arg0 : i32, i32
  }
  func.func @transform_4(%arg0: i32) -> (i32, i32) {
    %c0_i32 = arith.constant 0 : i32
    %c0_i32_0 = arith.constant 0 : i32
    return %c0_i32, %arg0 : i32, i32
  }
}

</mosaic_0001>

<llo_original>
// kernel: tpu_custom_call.1
$region0: #{tpu_custom_call.1}
  #allocation0 [shape = 'u32[]', space=smem, size = 0x4, offset = 0x4, fixed_abs, tag = 'smem constant byte address 0x4 - core index']
  #allocation1 [shape = 'u32[144,128]{1,0:T(1,128)}', space=vmem, size = 0x12000, scoped, tag = 'internal scratch']
  #allocation2 [shape = 'f32[1]{0:T(128)S(6)}', space=smem, size = 0x200, scoped, tag = 'scoped memory for tpu_custom_call.1']
  %s0 = inlined_call_operand.vmem [shape: f32[128,32], index: 0, kind: input, shape index: {}]
  %s1 = inlined_call_operand.vmem [shape: f32[1,32], index: 1, kind: input, shape index: {}]
  %s2 = inlined_call_operand.<no memory space> [shape: f32[1], index: 2, kind: input, shape index: {}]
  %s3 = inlined_call_operand.vmem [shape: f32[1,128], index: 3, kind: input, shape index: {}]
  %s4 = inlined_call_operand.hbm [shape: f32[1,128], index: 4, kind: output, shape index: {}]
  %s5 = sld [smem:[#allocation0]]
  $region26: #{tpu_custom_call.1} parent=0
    _
  %s7 = ssub.s32 1, %s5
  %s8 = scalar_select 0, %s7, %s5
  %9 = sst [smem:[#allocation2]] %s2
  $region1: #{tpu_custom_call.1} parent=0
    #allocation3 [shape = 'u8[512]{0}', space=vmem, size = 0x400, scoped, tag = 'output window, operand 0, single buffered']
    #allocation4 [shape = 's32[1]{0}', space=sflag, size = 0x4, scoped, tag = 'scoped memory for tpu_custom_call.1']
    %10 = vsyncpa [#allocation4], 0
    // Predicated region
    $region2: #{tpu_custom_call.1} parent=1 // pred_check
      _
    $region3: #{tpu_custom_call.1} parent=1 // pred_check_branch
      %12 = sbr.rel (0) target = $region5
    $region4: #{tpu_custom_call.1} parent=1 // pred_region
      _
    $region5: #{tpu_custom_call.1} parent=1 // pred_fallthru
      _
    // Predicated region
    $region6: #{tpu_custom_call.1} parent=1 // pred_check
      _
    $region7: #{tpu_custom_call.1} parent=1 // pred_check_branch
      %14 = sbr.rel (0) target = $region9
    $region8: #{tpu_custom_call.1} parent=1 // pred_region
      _
    $region9: #{tpu_custom_call.1} parent=1 // pred_fallthru
      _
    // Predicated region
    $region10: #{tpu_custom_call.1} parent=1 // pred_check
      _
    $region11: #{tpu_custom_call.1} parent=1 // pred_check_branch
      %16 = sbr.rel (0) target = $region13
    $region12: #{tpu_custom_call.1} parent=1 // pred_region
      _
    $region13: #{tpu_custom_call.1} parent=1 // pred_fallthru
      _
    // Predicated region
    $region14: #{tpu_custom_call.1} parent=1 // pred_check
      _
    $region15: #{tpu_custom_call.1} parent=1 // pred_check_branch
      %18 = sbr.rel (0) target = $region17
    $region16: #{tpu_custom_call.1} parent=1 // pred_region
      _
    $region17: #{tpu_custom_call.1} parent=1 // pred_fallthru
      _
    %v19 = vld [vmem:[%s0] sm:$0xff]
    %v20 = vld [vmem:[%s0 + $0x8] sm:$0xff]
    %v21 = vld [vmem:[%s0 + $0x10] sm:$0xff]
    %v22 = vld [vmem:[%s0 + $0x18] sm:$0xff]
    %v23 = vld [vmem:[%s0 + $0x20] sm:$0xff]
    %v24 = vld [vmem:[%s0 + $0x28] sm:$0xff]
    %v25 = vld [vmem:[%s0 + $0x30] sm:$0xff]
    %v26 = vld [vmem:[%s0 + $0x38] sm:$0xff]
    %v27 = vld [vmem:[%s0 + $0x40] sm:$0xff]
    %v28 = vld [vmem:[%s0 + $0x48] sm:$0xff]
    %v29 = vld [vmem:[%s0 + $0x50] sm:$0xff]
    %v30 = vld [vmem:[%s0 + $0x58] sm:$0xff]
    %v31 = vld [vmem:[%s0 + $0x60] sm:$0xff]
    %v32 = vld [vmem:[%s0 + $0x68] sm:$0xff]
    %v33 = vld [vmem:[%s0 + $0x70] sm:$0xff]
    %v34 = vld [vmem:[%s0 + $0x78] sm:$0xff]
    %v35 = vld [vmem:[%s1] sm:$0x1]
    %v37 = vlaneseq
    %v38 = vshrl.u32 %v37, 7
    %v39 = vsub.s32 0, %v38
    %v40 = vrot.slane %v35, %v39
    %v42 = vmul.f32 %v19, %v40
    %v43 = vmul.f32 %v20, %v40
    %v44 = vmul.f32 %v21, %v40
    %v45 = vmul.f32 %v22, %v40
    %v46 = vmul.f32 %v23, %v40
    %v47 = vmul.f32 %v24, %v40
    %v48 = vmul.f32 %v25, %v40
    %v49 = vmul.f32 %v26, %v40
    %v50 = vmul.f32 %v27, %v40
    %v51 = vmul.f32 %v28, %v40
    %v52 = vmul.f32 %v29, %v40
    %v53 = vmul.f32 %v30, %v40
    %v54 = vmul.f32 %v31, %v40
    %v55 = vmul.f32 %v32, %v40
    %v56 = vmul.f32 %v33, %v40
    %v57 = vmul.f32 %v34, %v40
    %vm58 = vcmask 261120
    %v59 = vsel %vm58, %v42, 0.0
    %60 = vadd.xlane.f32.xlu0 %v59
    %v61 = vpop.xlane.xlu0 %60
    %v62 = vsel %vm58, %v43, 0.0
    %63 = vadd.xlane.f32.xlu0 %v62
    %v64 = vpop.xlane.xlu0 %63
    %v65 = vsel %vm58, %v44, 0.0
    %66 = vadd.xlane.f32.xlu0 %v65
    %v67 = vpop.xlane.xlu0 %66
    %v68 = vsel %vm58, %v45, 0.0
    %69 = vadd.xlane.f32.xlu0 %v68
    %v70 = vpop.xlane.xlu0 %69
    %v71 = vsel %vm58, %v46, 0.0
    %72 = vadd.xlane.f32.xlu0 %v71
    %v73 = vpop.xlane.xlu0 %72
    %v74 = vsel %vm58, %v47, 0.0
    %75 = vadd.xlane.f32.xlu0 %v74
    %v76 = vpop.xlane.xlu0 %75
    %v77 = vsel %vm58, %v48, 0.0
    %78 = vadd.xlane.f32.xlu0 %v77
    %v79 = vpop.xlane.xlu0 %78
    %v80 = vsel %vm58, %v49, 0.0
    %81 = vadd.xlane.f32.xlu0 %v80
    %v82 = vpop.xlane.xlu0 %81
    %v83 = vsel %vm58, %v50, 0.0
    %84 = vadd.xlane.f32.xlu0 %v83
    %v85 = vpop.xlane.xlu0 %84
    %v86 = vsel %vm58, %v51, 0.0
    %87 = vadd.xlane.f32.xlu0 %v86
    %v88 = vpop.xlane.xlu0 %87
    %v89 = vsel %vm58, %v52, 0.0
    %90 = vadd.xlane.f32.xlu0 %v89
    %v91 = vpop.xlane.xlu0 %90
    %v92 = vsel %vm58, %v53, 0.0
    %93 = vadd.xlane.f32.xlu0 %v92
    %v94 = vpop.xlane.xlu0 %93
    %v95 = vsel %vm58, %v54, 0.0
    %96 = vadd.xlane.f32.xlu0 %v95
    %v97 = vpop.xlane.xlu0 %96
    %v98 = vsel %vm58, %v55, 0.0
    %99 = vadd.xlane.f32.xlu0 %v98
    %v100 = vpop.xlane.xlu0 %99
    %v101 = vsel %vm58, %v56, 0.0
    %102 = vadd.xlane.f32.xlu0 %v101
    %v103 = vpop.xlane.xlu0 %102
    %v104 = vsel %vm58, %v57, 0.0
    %105 = vadd.xlane.f32.xlu0 %v104
    %v106 = vpop.xlane.xlu0 %105
    %s107 = sld [smem:[#allocation2]]
    %v108 = vstv %s107
    %v109 = vadd.f32 %v61, %v108
    %v110 = vadd.f32 %v64, %v108
    %v111 = vadd.f32 %v67, %v108
    %v112 = vadd.f32 %v70, %v108
    %v113 = vadd.f32 %v73, %v108
    %v114 = vadd.f32 %v76, %v108
    %v115 = vadd.f32 %v79, %v108
    %v116 = vadd.f32 %v82, %v108
    %v117 = vadd.f32 %v85, %v108
    %v118 = vadd.f32 %v88, %v108
    %v119 = vadd.f32 %v91, %v108
    %v120 = vadd.f32 %v94, %v108
    %v121 = vadd.f32 %v97, %v108
    %v122 = vadd.f32 %v100, %v108
    %v123 = vadd.f32 %v103, %v108
    %v124 = vadd.f32 %v106, %v108
    %v125 = vld [vmem:[%s3] sm:$0x1]
    %v127 = vlaneseq
    %v128 = vshrl.u32 %v127, 7
    %v129 = vsub.s32 0, %v128
    %v130 = vrot.slane %v125, %v129
    %132 = vbcast.lane.b32.xlu0 %v130, 256
    %v133 = vpop.permute.xlu0 %132
    %s135 = sor.u32 256, 8
    %136 = vbcast.lane.b32.xlu0 %v130, %s135
    %v137 = vpop.permute.xlu0 %136
    %s139 = sor.u32 256, 16
    %140 = vbcast.lane.b32.xlu0 %v130, %s139
    %v141 = vpop.permute.xlu0 %140
    %s143 = sor.u32 256, 24
    %144 = vbcast.lane.b32.xlu0 %v130, %s143
    %v145 = vpop.permute.xlu0 %144
    %s147 = sor.u32 256, 32
    %148 = vbcast.lane.b32.xlu0 %v130, %s147
    %v149 = vpop.permute.xlu0 %148
    %s151 = sor.u32 256, 40
    %152 = vbcast.lane.b32.xlu0 %v130, %s151
    %v153 = vpop.permute.xlu0 %152
    %s155 = sor.u32 256, 48
    %156 = vbcast.lane.b32.xlu0 %v130, %s155
    %v157 = vpop.permute.xlu0 %156
    %s159 = sor.u32 256, 56
    %160 = vbcast.lane.b32.xlu0 %v130, %s159
    %v161 = vpop.permute.xlu0 %160
    %s163 = sor.u32 256, 64
    %164 = vbcast.lane.b32.xlu0 %v130, %s163
    %v165 = vpop.permute.xlu0 %164
    %s167 = sor.u32 256, 72
    %168 = vbcast.lane.b32.xlu0 %v130, %s167
    %v169 = vpop.permute.xlu0 %168
    %s171 = sor.u32 256, 80
    %172 = vbcast.lane.b32.xlu0 %v130, %s171
    %v173 = vpop.permute.xlu0 %172
    %s175 = sor.u32 256, 88
    %176 = vbcast.lane.b32.xlu0 %v130, %s175
    %v177 = vpop.permute.xlu0 %176
    %s179 = sor.u32 256, 96
    %180 = vbcast.lane.b32.xlu0 %v130, %s179
    %v181 = vpop.permute.xlu0 %180
    %s183 = sor.u32 256, 104
    %184 = vbcast.lane.b32.xlu0 %v130, %s183
    %v185 = vpop.permute.xlu0 %184
    %s187 = sor.u32 256, 112
    %188 = vbcast.lane.b32.xlu0 %v130, %s187
    %v189 = vpop.permute.xlu0 %188
    %s191 = sor.u32 256, 120
    %192 = vbcast.lane.b32.xlu0 %v130, %s191
    %v193 = vpop.permute.xlu0 %192
    %v210 = vmul.f32 %v109, %v133
    %v211 = vmul.f32 %v110, %v137
    %v212 = vmul.f32 %v111, %v141
    %v213 = vmul.f32 %v112, %v145
    %v214 = vmul.f32 %v113, %v149
    %v215 = vmul.f32 %v114, %v153
    %v216 = vmul.f32 %v115, %v157
    %v217 = vmul.f32 %v116, %v161
    %v218 = vmul.f32 %v117, %v165
    %v219 = vmul.f32 %v118, %v169
    %v220 = vmul.f32 %v119, %v173
    %v221 = vmul.f32 %v120, %v177
    %v222 = vmul.f32 %v121, %v181
    %v223 = vmul.f32 %v122, %v185
    %v224 = vmul.f32 %v123, %v189
    %v225 = vmul.f32 %v124, %v193
    %v226 = vsub.f32 1.0, %v125
    %v227 = vmul.f32 %v226, 1e+30
    %v229 = vlaneseq
    %v230 = vshrl.u32 %v229, 7
    %v231 = vsub.s32 0, %v230
    %v232 = vrot.slane %v227, %v231
    %234 = vbcast.lane.b32.xlu0 %v232, 256
    %v235 = vpop.permute.xlu0 %234
    %s237 = sor.u32 256, 8
    %238 = vbcast.lane.b32.xlu0 %v232, %s237
    %v239 = vpop.permute.xlu0 %238
    %s241 = sor.u32 256, 16
    %242 = vbcast.lane.b32.xlu0 %v232, %s241
    %v243 = vpop.permute.xlu0 %242
    %s245 = sor.u32 256, 24
    %246 = vbcast.lane.b32.xlu0 %v232, %s245
    %v247 = vpop.permute.xlu0 %246
    %s249 = sor.u32 256, 32
    %250 = vbcast.lane.b32.xlu0 %v232, %s249
    %v251 = vpop.permute.xlu0 %250
    %s253 = sor.u32 256, 40
    %254 = vbcast.lane.b32.xlu0 %v232, %s253
    %v255 = vpop.permute.xlu0 %254
    %s257 = sor.u32 256, 48
    %258 = vbcast.lane.b32.xlu0 %v232, %s257
    %v259 = vpop.permute.xlu0 %258
    %s261 = sor.u32 256, 56
    %262 = vbcast.lane.b32.xlu0 %v232, %s261
    %v263 = vpop.permute.xlu0 %262
    %s265 = sor.u32 256, 64
    %266 = vbcast.lane.b32.xlu0 %v232, %s265
    %v267 = vpop.permute.xlu0 %266
    %s269 = sor.u32 256, 72
    %270 = vbcast.lane.b32.xlu0 %v232, %s269
    %v271 = vpop.permute.xlu0 %270
    %s273 = sor.u32 256, 80
    %274 = vbcast.lane.b32.xlu0 %v232, %s273
    %v275 = vpop.permute.xlu0 %274
    %s277 = sor.u32 256, 88
    %278 = vbcast.lane.b32.xlu0 %v232, %s277
    %v279 = vpop.permute.xlu0 %278
    %s281 = sor.u32 256, 96
    %282 = vbcast.lane.b32.xlu0 %v232, %s281
    %v283 = vpop.permute.xlu0 %282
    %s285 = sor.u32 256, 104
    %286 = vbcast.lane.b32.xlu0 %v232, %s285
    %v287 = vpop.permute.xlu0 %286
    %s289 = sor.u32 256, 112
    %290 = vbcast.lane.b32.xlu0 %v232, %s289
    %v291 = vpop.permute.xlu0 %290
    %s293 = sor.u32 256, 120
    %294 = vbcast.lane.b32.xlu0 %v232, %s293
    %v295 = vpop.permute.xlu0 %294
    %v312 = vsub.f32 %v210, %v235
    %v313 = vsub.f32 %v211, %v239
    %v314 = vsub.f32 %v212, %v243
    %v315 = vsub.f32 %v213, %v247
    %v316 = vsub.f32 %v214, %v251
    %v317 = vsub.f32 %v215, %v255
    %v318 = vsub.f32 %v216, %v259
    %v319 = vsub.f32 %v217, %v263
    %v320 = vsub.f32 %v218, %v267
    %v321 = vsub.f32 %v219, %v271
    %v322 = vsub.f32 %v220, %v275
    %v323 = vsub.f32 %v221, %v279
    %v324 = vsub.f32 %v222, %v283
    %v325 = vsub.f32 %v223, %v287
    %v326 = vsub.f32 %v224, %v291
    %v327 = vsub.f32 %v225, %v295
    %344 = vset.pattern.permute.xlu0 0
    %345 = vperm.xlu0 %344, %v312
    %v346 = vpop.permute.xlu0 %345
    %347 = vset.pattern.permute.xlu0 0
    %348 = vperm.xlu0 %347, %v313
    %v349 = vpop.permute.xlu0 %348
    %350 = vset.pattern.permute.xlu0 0
    %351 = vperm.xlu0 %350, %v314
    %v352 = vpop.permute.xlu0 %351
    %353 = vset.pattern.permute.xlu0 0
    %354 = vperm.xlu0 %353, %v315
    %v355 = vpop.permute.xlu0 %354
    %356 = vset.pattern.permute.xlu0 0
    %357 = vperm.xlu0 %356, %v316
    %v358 = vpop.permute.xlu0 %357
    %359 = vset.pattern.permute.xlu0 0
    %360 = vperm.xlu0 %359, %v317
    %v361 = vpop.permute.xlu0 %360
    %362 = vset.pattern.permute.xlu0 0
    %363 = vperm.xlu0 %362, %v318
    %v364 = vpop.permute.xlu0 %363
    %365 = vset.pattern.permute.xlu0 0
    %366 = vperm.xlu0 %365, %v319
    %v367 = vpop.permute.xlu0 %366
    %368 = vset.pattern.permute.xlu0 0
    %369 = vperm.xlu0 %368, %v320
    %v370 = vpop.permute.xlu0 %369
    %371 = vset.pattern.permute.xlu0 0
    %372 = vperm.xlu0 %371, %v321
    %v373 = vpop.permute.xlu0 %372
    %374 = vset.pattern.permute.xlu0 0
    %375 = vperm.xlu0 %374, %v322
    %v376 = vpop.permute.xlu0 %375
    %377 = vset.pattern.permute.xlu0 0
    %378 = vperm.xlu0 %377, %v323
    %v379 = vpop.permute.xlu0 %378
    %380 = vset.pattern.permute.xlu0 0
    %381 = vperm.xlu0 %380, %v324
    %v382 = vpop.permute.xlu0 %381
    %383 = vset.pattern.permute.xlu0 0
    %384 = vperm.xlu0 %383, %v325
    %v385 = vpop.permute.xlu0 %384
    %386 = vset.pattern.permute.xlu0 0
    %387 = vperm.xlu0 %386, %v326
    %v388 = vpop.permute.xlu0 %387
    %389 = vset.pattern.permute.xlu0 0
    %390 = vperm.xlu0 %389, %v327
    %v391 = vpop.permute.xlu0 %390
    %v392 = vlaneseq
    %v393 = vand.u32 %v392, 127
    %v394 = vlaneseq
    %v395 = vshrl.u32 %v394, 7
    %v396 = vsub.s32 %v393, %v395
    %v397 = vrot.slane %v346, %v396
    %v398 = vadd.s32 %v393, 4294967288
    %v399 = vlaneseq
    %v400 = vshrl.u32 %v399, 7
    %v401 = vsub.s32 %v398, %v400
    %v402 = vrot.slane %v349, %v401
    %vm403 = vcmask 130112
    %v404 = vsel %vm403, %v402, %v397
    %v405 = vadd.s32 %v393, 4294967280
    %v406 = vlaneseq
    %v407 = vshrl.u32 %v406, 7
    %v408 = vsub.s32 %v405, %v407
    %v409 = vrot.slane %v352, %v408
    %vm410 = vcmask 195712
    %v411 = vsel %vm410, %v409, %v404
    %v412 = vadd.s32 %v393, 4294967272
    %v413 = vlaneseq
    %v414 = vshrl.u32 %v413, 7
    %v415 = vsub.s32 %v412, %v414
    %v416 = vrot.slane %v355, %v415
    %vm417 = vcmask 261312
    %v418 = vsel %vm417, %v416, %v411
    %v419 = vadd.s32 %v393, 4294967264
    %v420 = vlaneseq
    %v421 = vshrl.u32 %v420, 7
    %v422 = vsub.s32 %v419, %v421
    %v423 = vrot.slane %v358, %v422
    %vm424 = vcmask 326912
    %v425 = vsel %vm424, %v423, %v418
    %v426 = vadd.s32 %v393, 4294967256
    %v427 = vlaneseq
    %v428 = vshrl.u32 %v427, 7
    %v429 = vsub.s32 %v426, %v428
    %v430 = vrot.slane %v361, %v429
    %vm431 = vcmask 392512
    %v432 = vsel %vm431, %v430, %v425
    %v433 = vadd.s32 %v393, 4294967248
    %v434 = vlaneseq
    %v435 = vshrl.u32 %v434, 7
    %v436 = vsub.s32 %v433, %v435
    %v437 = vrot.slane %v364, %v436
    %vm438 = vcmask 458112
    %v439 = vsel %vm438, %v437, %v432
    %v440 = vadd.s32 %v393, 4294967240
    %v441 = vlaneseq
    %v442 = vshrl.u32 %v441, 7
    %v443 = vsub.s32 %v440, %v442
    %v444 = vrot.slane %v367, %v443
    %vm445 = vcmask 523712
    %v446 = vsel %vm445, %v444, %v439
    %v447 = vadd.s32 %v393, 4294967232
    %v448 = vlaneseq
    %v449 = vshrl.u32 %v448, 7
    %v450 = vsub.s32 %v447, %v449
    %v451 = vrot.slane %v370, %v450
    %vm452 = vcmask 589312
    %v453 = vsel %vm452, %v451, %v446
    %v454 = vadd.s32 %v393, 4294967224
    %v455 = vlaneseq
    %v456 = vshrl.u32 %v455, 7
    %v457 = vsub.s32 %v454, %v456
    %v458 = vrot.slane %v373, %v457
    %vm459 = vcmask 654912
    %v460 = vsel %vm459, %v458, %v453
    %v461 = vadd.s32 %v393, 4294967216
    %v462 = vlaneseq
    %v463 = vshrl.u32 %v462, 7
    %v464 = vsub.s32 %v461, %v463
    %v465 = vrot.slane %v376, %v464
    %vm466 = vcmask 720512
    %v467 = vsel %vm466, %v465, %v460
    %v468 = vadd.s32 %v393, 4294967208
    %v469 = vlaneseq
    %v470 = vshrl.u32 %v469, 7
    %v471 = vsub.s32 %v468, %v470
    %v472 = vrot.slane %v379, %v471
    %vm473 = vcmask 786112
    %v474 = vsel %vm473, %v472, %v467
    %v475 = vadd.s32 %v393, 4294967200
    %v476 = vlaneseq
    %v477 = vshrl.u32 %v476, 7
    %v478 = vsub.s32 %v475, %v477
    %v479 = vrot.slane %v382, %v478
    %vm480 = vcmask 851712
    %v481 = vsel %vm480, %v479, %v474
    %v482 = vadd.s32 %v393, 4294967192
    %v483 = vlaneseq
    %v484 = vshrl.u32 %v483, 7
    %v485 = vsub.s32 %v482, %v484
    %v486 = vrot.slane %v385, %v485
    %vm487 = vcmask 917312
    %v488 = vsel %vm487, %v486, %v481
    %v489 = vadd.s32 %v393, 4294967184
    %v490 = vlaneseq
    %v491 = vshrl.u32 %v490, 7
    %v492 = vsub.s32 %v489, %v491
    %v493 = vrot.slane %v388, %v492
    %vm494 = vcmask 982912
    %v495 = vsel %vm494, %v493, %v488
    %v496 = vadd.s32 %v393, 4294967176
    %v497 = vlaneseq
    %v498 = vshrl.u32 %v497, 7
    %v499 = vsub.s32 %v496, %v498
    %v500 = vrot.slane %v391, %v499
    %vm501 = vcmask 1048512
    %v502 = vsel %vm501, %v500, %v495
    %504 = vst [vmem:[#allocation3] sm:$0x1] %v502
    // Predicated region
    $region18: #{tpu_custom_call.1} parent=1 // pred_check
      _
    $region19: #{tpu_custom_call.1} parent=1 // pred_check_branch
      %506 = sbr.rel (0) target = $region21
    $region20: #{tpu_custom_call.1} parent=1 // pred_region
      %s508 = ssub.s32 16, 16
      %509 = vsyncadd [#allocation4], %s508
      %s511 = sshll.u32 [#allocation3], 4
      %s512 = int_to_ptr.vmem [resolvable:$true] %s511
      %514 = dma.vmem_to_hbm [thread:$0]  %s512, 16, %s4, [#allocation4]
    $region21: #{tpu_custom_call.1} parent=1 // pred_fallthru
      _
    // Predicated region
    $region22: #{tpu_custom_call.1} parent=1 // pred_check
      _
    $region23: #{tpu_custom_call.1} parent=1 // pred_check_branch
      %516 = sbr.rel (0) target = $region25
    $region24: #{tpu_custom_call.1} parent=1 // pred_region
      %517 = dma.done [#allocation4], 16
    $region25: #{tpu_custom_call.1} parent=1 // pred_fallthru
      _
    %518 = vsyncpa [#allocation4], 1

</llo_original>
